<compile_context>
chip_gen: v7x
topology: tpu7x:2x2x1
jax: 0.10.0
libtpu: 0.0.40
codegen_flags: <defaults>
</compile_context>

<pallas_src>
import jax
import jax.numpy as jnp
from jax.experimental import pallas as pl
from jax.experimental.pallas import tpu as pltpu


def _round_up(x, m):
    return ((x + m - 1) // m) * m


def _patch_embed_kernel(x_ref, w_ref, b_ref, o_ref):
    # x_ref: (TM, Kp) flattened patches; w_ref: (Kp, Ep); b_ref: (1, Ep); o_ref: (TM, Ep)
    acc = jnp.dot(x_ref[...], w_ref[...], preferred_element_type=jnp.float32)
    o_ref[...] = (acc + b_ref[...].astype(jnp.float32)).astype(o_ref.dtype)


def prepare_patch_embed_weights(weight, bias):
    """Fold PyTorch conv weight (E, C, P, P) + bias (E,) into padded matmul operands.

    Returns (w_mat, b_mat) of shapes (Kp, Ep) / (1, Ep) with Kp/Ep rounded up to
    multiples of 128. Hoist / cache this outside the per-call hot path.
    """
    E, C, P, _ = weight.shape
    K = C * P * P
    Kp = _round_up(K, 128)
    Ep = _round_up(E, 128)
    w_mat = weight.reshape(E, K).T            # (K, E), (c,i,j)-major rows
    b_mat = bias.reshape(1, E)
    if Kp != K or Ep != E:
        w_mat = jnp.pad(w_mat, ((0, Kp - K), (0, Ep - E)))
        b_mat = jnp.pad(b_mat, ((0, 0), (0, Ep - E)))
    return w_mat, b_mat


def _patch_embed_matmul(xp, w_mat, b_mat, out_dtype, tm=256):
    """xp: (M, K) flattened patches (unpadded); w_mat: (Kp, Ep); b_mat: (1, Ep)."""
    M, K = xp.shape
    Kp, Ep = w_mat.shape

    # Tile size: multiple of 8, capped so tiny problems don't over-pad.
    tm = min(tm, _round_up(M, 8))
    Mp = _round_up(M, tm)
    if Mp != M or Kp != K:
        xp = jnp.pad(xp, ((0, Mp - M), (0, Kp - K)))

    grid = (Mp // tm,)

    x_bytes = jnp.dtype(xp.dtype).itemsize
    w_bytes = jnp.dtype(w_mat.dtype).itemsize
    o_bytes = jnp.dtype(out_dtype).itemsize
    cost = pl.CostEstimate(
        flops=2 * Mp * Kp * Ep,
        transcendentals=0,
        bytes_accessed=Mp * Kp * x_bytes + Kp * Ep * w_bytes
        + Ep * w_bytes + Mp * Ep * o_bytes,
    )

    out = pl.pallas_call(
        _patch_embed_kernel,
        out_shape=jax.ShapeDtypeStruct((Mp, Ep), out_dtype),
        grid_spec=pltpu.PrefetchScalarGridSpec(
            num_scalar_prefetch=0,
            grid=grid,
            in_specs=[
                pl.BlockSpec((tm, Kp), lambda i: (i, 0)),   # streamed patch rows
                pl.BlockSpec((Kp, Ep), lambda i: (0, 0)),   # resident weight
                pl.BlockSpec((1, Ep), lambda i: (0, 0)),    # resident bias
            ],
            out_specs=pl.BlockSpec((tm, Ep), lambda i: (i, 0)),
        ),
        compiler_params=pltpu.CompilerParams(
            dimension_semantics=("parallel",),
            vmem_limit_bytes=64 * 1024 * 1024,
        ),
        cost_estimate=cost,
    )(xp, w_mat, b_mat)
    return out


def patch_embedding(x_nchw, weight, bias, patch_size, tm=256):
    """x_nchw: (B, C, H, W); weight: (E, C, P, P) [PyTorch conv layout]; bias: (E,)."""
    B, C, H, W = x_nchw.shape
    E = weight.shape[0]
    P = patch_size
    assert H % P == 0 and W % P == 0
    hp, wp = H // P, W // P
    num_patches = hp * wp

    # Patchify glue (pure layout): (B,C,H,W) -> (M, K) rows in (c,i,j) order to match
    # the PyTorch conv-weight flattening.
    # TODO(synk): at large B this transpose is an extra HBM round trip unless XLA fuses
    # it into the pallas_call input DMA; folding the patch gather into the kernel's
    # BlockSpec/index_map would remove it entirely.
    xp = x_nchw.reshape(B, C, hp, P, wp, P)
    xp = xp.transpose(0, 2, 4, 1, 3, 5).reshape(B * num_patches, C * P * P)

    # In a real model, prepare_patch_embed_weights() should be hoisted / cached.
    w_mat, b_mat = prepare_patch_embed_weights(weight, bias)

    out = _patch_embed_matmul(xp, w_mat, b_mat, x_nchw.dtype, tm=tm)
    out = out[: B * num_patches, :E]                 # strip M / E padding
    return out.reshape(B, num_patches, E)


if __name__ == "__main__":
    # Small shapes consistent with the module: B=2, C=4, H=W=16, patch=4, E=32.
    B, C, H, W = 2, 4, 16, 16
    P, E = 4, 32

    key = jax.random.PRNGKey(0)
    kx, kw, kb = jax.random.split(key, 3)
    x = jax.random.normal(kx, (B, C, H, W), dtype=jnp.float32)
    weight = jax.random.normal(kw, (E, C, P, P), dtype=jnp.float32) * 0.02
    bias = jax.random.normal(kb, (E,), dtype=jnp.float32) * 0.02

    out = patch_embedding(x, weight, bias, P)
    out = jax.block_until_ready(out)

    # Reference check against lax conv (same math as torch.nn.Conv2d, NCHW).
    ref = jax.lax.conv_general_dilated(
        x, weight, window_strides=(P, P), padding="VALID",
        dimension_numbers=("NCHW", "OIHW", "NCHW"))
    ref = ref + bias.reshape(1, E, 1, 1)
    ref = ref.reshape(B, E, -1).transpose(0, 2, 1)   # (B, num_patches, E)

    assert out.shape == (B, (H // P) * (W // P), E)
    assert jnp.allclose(out, ref, atol=1e-4, rtol=1e-4)
    print("KERNEL_OK")
</pallas_src>

<mosaic_0001>
module attributes {stable_mosaic.version = 11 : i64} {
  func.func @_patch_embed_kernel(%arg0: i32, %arg1: memref<32x128xf32, #tpu.memory_space<vmem>>, %arg2: memref<128x128xf32, #tpu.memory_space<vmem>>, %arg3: memref<1x128xf32, #tpu.memory_space<vmem>>, %arg4: memref<32x128xf32, #tpu.memory_space<vmem>>) attributes {dimension_semantics = [#tpu.dimension_semantics<parallel>], iteration_bounds = array<i64: 1>, scalar_prefetch = 0 : i64, scratch_operands = 0 : i64, tpu.core_type = #tpu.core_type<tc>, window_params = [{transform_indices = @transform_0, window_bounds = array<i64: 32, 128>}, {pipeline_mode = #tpu.pipeline_mode<synchronous>, transform_indices = @transform_1, window_bounds = array<i64: 128, 128>}, {pipeline_mode = #tpu.pipeline_mode<synchronous>, transform_indices = @transform_2, window_bounds = array<i64: 1, 128>}, {transform_indices = @transform_3, window_bounds = array<i64: 32, 128>}]} {
    %c0 = arith.constant 0 : index
    %c0_0 = arith.constant 0 : index
    %0 = vector.load %arg1[%c0, %c0_0] : memref<32x128xf32, #tpu.memory_space<vmem>>, vector<32x128xf32>
    %c0_1 = arith.constant 0 : index
    %c0_2 = arith.constant 0 : index
    %1 = vector.load %arg2[%c0_1, %c0_2] : memref<128x128xf32, #tpu.memory_space<vmem>>, vector<128x128xf32>
    %cst = arith.constant dense<0.000000e+00> : vector<32x128xf32>
    %2 = tpu.matmul %0, %1, %cst {dimension_numbers = #tpu.dot_dimension_numbers<[1], [0], [0], [1], [0, 0, 1, 1], [], []>} : vector<32x128xf32>, vector<128x128xf32>, vector<32x128xf32> -> vector<32x128xf32>
    %c0_3 = arith.constant 0 : index
    %c0_4 = arith.constant 0 : index
    %3 = vector.load %arg3[%c0_3, %c0_4] : memref<1x128xf32, #tpu.memory_space<vmem>>, vector<1x128xf32>
    %4 = vector.broadcast %3 : vector<1x128xf32> to vector<32x128xf32>
    %5 = arith.addf %2, %4 : vector<32x128xf32>
    %c0_5 = arith.constant 0 : index
    %c0_6 = arith.constant 0 : index
    %6 = vector.load %arg4[%c0_5, %c0_6] : memref<32x128xf32, #tpu.memory_space<vmem>>, vector<32x128xf32>
    tpu.vector_store %arg4[%c0_5, %c0_6], %5 {strides = array<i32>} : memref<32x128xf32, #tpu.memory_space<vmem>>, vector<32x128xf32>,
    return
  }
  func.func @transform_0(%arg0: i32) -> (i32, i32) {
    %c0_i32 = arith.constant 0 : i32
    %c0_i32_0 = arith.constant 0 : i32
    return %arg0, %c0_i32 : i32, i32
  }
  func.func @transform_1(%arg0: i32) -> (i32, i32) {
    %c0_i32 = arith.constant 0 : i32
    %c0_i32_0 = arith.constant 0 : i32
    %c0_i32_1 = arith.constant 0 : i32
    return %c0_i32, %c0_i32_0 : i32, i32
  }
  func.func @transform_2(%arg0: i32) -> (i32, i32) {
    %c0_i32 = arith.constant 0 : i32
    %c0_i32_0 = arith.constant 0 : i32
    %c0_i32_1 = arith.constant 0 : i32
    return %c0_i32, %c0_i32_0 : i32, i32
  }
  func.func @transform_3(%arg0: i32) -> (i32, i32) {
    %c0_i32 = arith.constant 0 : i32
    %c0_i32_0 = arith.constant 0 : i32
    return %arg0, %c0_i32 : i32, i32
  }
}

</mosaic_0001>

<llo_original>
// kernel: tpu_custom_call.1
$region0: #{tpu_custom_call.1}
  #allocation0 [shape = 'u32[]', space=smem, size = 0x4, offset = 0x4, fixed_abs, tag = 'smem constant byte address 0x4 - core index']
  #allocation1 [shape = 'u32[144,128]{1,0:T(1,128)}', space=vmem, size = 0x12000, scoped, tag = 'internal scratch']
  %s0 = inlined_call_operand.hbm [shape: f32[32,128], index: 0, kind: input, shape index: {}]
  %s1 = inlined_call_operand.hbm [shape: f32[128,128], index: 1, kind: input, shape index: {}]
  %s2 = inlined_call_operand.hbm [shape: f32[1,128], index: 2, kind: input, shape index: {}]
  %s3 = inlined_call_operand.hbm [shape: f32[32,128], index: 3, kind: output, shape index: {}]
  %s4 = sld [smem:[#allocation0]]
  $region34: #{tpu_custom_call.1} parent=0
    _
  %s6 = ssub.s32 1, %s4
  %s7 = scalar_select 0, %s6, %s4
  $region1: #{tpu_custom_call.1} parent=0
    #allocation2 [shape = 'u8[16384]{0}', space=vmem, size = 0x4000, scoped, tag = 'input window, operand 0, single buffered']
    #allocation3 [shape = 's32[1]{0}', space=sflag, size = 0x4, scoped, tag = 'scoped memory for tpu_custom_call.1']
    #allocation4 [shape = 's32[1]{0}', space=sflag, size = 0x4, scoped, tag = 'scoped memory for tpu_custom_call.1']
    #allocation5 [shape = 'u8[65536]{0}', space=vmem, size = 0x10000, scoped, tag = 'input window, operand 1, single buffered']
    #allocation6 [shape = 's32[1]{0}', space=sflag, size = 0x4, scoped, tag = 'scoped memory for tpu_custom_call.1']
    #allocation7 [shape = 'u8[512]{0}', space=vmem, size = 0x400, scoped, tag = 'input window, operand 2, single buffered']
    #allocation8 [shape = 'u8[16384]{0}', space=vmem, size = 0x4000, scoped, tag = 'output window, operand 0, single buffered']
    %8 = vsyncpa [#allocation3], 0
    %9 = vsyncpa [#allocation6], 0
    %10 = vsyncpa [#allocation4], 0
    // Predicated region
    $region2: #{tpu_custom_call.1} parent=1 // pred_check
      _
    $region3: #{tpu_custom_call.1} parent=1 // pred_check_branch
      %12 = sbr.rel (0) target = $region5
    $region4: #{tpu_custom_call.1} parent=1 // pred_region
      %s14 = ssub.s32 512, 512
      %15 = vsyncadd [#allocation3], %s14
      %s16 = sshll.u32 [#allocation2], 4
      %s17 = int_to_ptr.vmem [resolvable:$true] %s16
      %22 = dma.hbm_to_vmem [thread:$0]  %s0, 512, %s17, [#allocation3], 128, 128, 8
    $region5: #{tpu_custom_call.1} parent=1 // pred_fallthru
      _
    // Predicated region
    $region6: #{tpu_custom_call.1} parent=1 // pred_check
      _
    $region7: #{tpu_custom_call.1} parent=1 // pred_check_branch
      %24 = sbr.rel (0) target = $region9
    $region8: #{tpu_custom_call.1} parent=1 // pred_region
      %s26 = ssub.s32 2048, 2048
      %27 = vsyncadd [#allocation6], %s26
      %s28 = sshll.u32 [#allocation5], 4
      %s29 = int_to_ptr.vmem [resolvable:$true] %s28
      %34 = dma.hbm_to_vmem [thread:$0]  %s1, 2048, %s29, [#allocation6], 128, 128, 8
    $region9: #{tpu_custom_call.1} parent=1 // pred_fallthru
      _
    // Predicated region
    $region10: #{tpu_custom_call.1} parent=1 // pred_check
      _
    $region11: #{tpu_custom_call.1} parent=1 // pred_check_branch
      %36 = sbr.rel (0) target = $region13
    $region12: #{tpu_custom_call.1} parent=1 // pred_region
      %s38 = ssub.s32 16, 16
      %39 = vsyncadd [#allocation6], %s38
      %s41 = sshll.u32 [#allocation7], 4
      %s42 = int_to_ptr.vmem [resolvable:$true] %s41
      %44 = dma.hbm_to_vmem [thread:$0]  %s2, 16, %s42, [#allocation6]
    $region13: #{tpu_custom_call.1} parent=1 // pred_fallthru
      _
    // Predicated region
    $region14: #{tpu_custom_call.1} parent=1 // pred_check
      _
    $region15: #{tpu_custom_call.1} parent=1 // pred_check_branch
      %46 = sbr.rel (0) target = $region17
    $region16: #{tpu_custom_call.1} parent=1 // pred_region
      %47 = dma.done [#allocation3], 512
    $region17: #{tpu_custom_call.1} parent=1 // pred_fallthru
      _
    // Predicated region
    $region18: #{tpu_custom_call.1} parent=1 // pred_check
      _
    $region19: #{tpu_custom_call.1} parent=1 // pred_check_branch
      %49 = sbr.rel (0) target = $region21
    $region20: #{tpu_custom_call.1} parent=1 // pred_region
      %50 = dma.done [#allocation6], 2048
    $region21: #{tpu_custom_call.1} parent=1 // pred_fallthru
      _
    // Predicated region
    $region22: #{tpu_custom_call.1} parent=1 // pred_check
      _
    $region23: #{tpu_custom_call.1} parent=1 // pred_check_branch
      %52 = sbr.rel (0) target = $region25
    $region24: #{tpu_custom_call.1} parent=1 // pred_region
      %53 = dma.done [#allocation6], 16
    $region25: #{tpu_custom_call.1} parent=1 // pred_fallthru
      _
    %v54 = vld [vmem:[#allocation2] sm:$0xff]
    %v55 = vld [vmem:[#allocation2 + $0x8] sm:$0xff]
    %v56 = vld [vmem:[#allocation2 + $0x10] sm:$0xff]
    %v57 = vld [vmem:[#allocation2 + $0x18] sm:$0xff]
    %v58 = vld [vmem:[#allocation5] sm:$0xff]
    %v59 = vld [vmem:[#allocation5 + $0x8] sm:$0xff]
    %v60 = vld [vmem:[#allocation5 + $0x10] sm:$0xff]
    %v61 = vld [vmem:[#allocation5 + $0x18] sm:$0xff]
    %v62 = vld [vmem:[#allocation5 + $0x20] sm:$0xff]
    %v63 = vld [vmem:[#allocation5 + $0x28] sm:$0xff]
    %v64 = vld [vmem:[#allocation5 + $0x30] sm:$0xff]
    %v65 = vld [vmem:[#allocation5 + $0x38] sm:$0xff]
    %v66 = vld [vmem:[#allocation5 + $0x40] sm:$0xff]
    %v67 = vld [vmem:[#allocation5 + $0x48] sm:$0xff]
    %v68 = vld [vmem:[#allocation5 + $0x50] sm:$0xff]
    %v69 = vld [vmem:[#allocation5 + $0x58] sm:$0xff]
    %v70 = vld [vmem:[#allocation5 + $0x60] sm:$0xff]
    %v71 = vld [vmem:[#allocation5 + $0x68] sm:$0xff]
    %v72 = vld [vmem:[#allocation5 + $0x70] sm:$0xff]
    %v73 = vld [vmem:[#allocation5 + $0x78] sm:$0xff]
    %v74 = vld [vmem:[#allocation7] sm:$0x1]
    %v76 = vlaneseq
    %v77 = vshrl.u32 %v76, 7
    %v78 = vsub.s32 0, %v77
    %v79 = vrot.slane %v74, %v78
    %81 = vmatprep.subr.mxu0 0.0
    %82 = vmatpush1.msra.mxu0 %v58
    %83 = vmatprep.subr.mxu0 0.0
    %84 = vmatpush1.msra.mxu0 %v59
    %85 = vmatprep.subr.mxu0 0.0
    %86 = vmatpush1.msra.mxu0 %v60
    %87 = vmatprep.subr.mxu0 0.0
    %88 = vmatpush1.msra.mxu0 %v61
    %89 = vmatprep.subr.mxu0 0.0
    %90 = vmatpush1.msra.mxu0 %v62
    %91 = vmatprep.subr.mxu0 0.0
    %92 = vmatpush1.msra.mxu0 %v63
    %93 = vmatprep.subr.mxu0 0.0
    %94 = vmatpush1.msra.mxu0 %v64
    %95 = vmatprep.subr.mxu0 0.0
    %96 = vmatpush1.msra.mxu0 %v65
    %97 = vmatprep.subr.mxu0 0.0
    %98 = vmatpush1.msra.mxu0 %v66
    %99 = vmatprep.subr.mxu0 0.0
    %100 = vmatpush1.msra.mxu0 %v67
    %101 = vmatprep.subr.mxu0 0.0
    %102 = vmatpush1.msra.mxu0 %v68
    %103 = vmatprep.subr.mxu0 0.0
    %104 = vmatpush1.msra.mxu0 %v69
    %105 = vmatprep.subr.mxu0 0.0
    %106 = vmatpush1.msra.mxu0 %v70
    %107 = vmatprep.subr.mxu0 0.0
    %108 = vmatpush1.msra.mxu0 %v71
    %109 = vmatprep.subr.mxu0 0.0
    %110 = vmatpush1.msra.mxu0 %v72
    %111 = vmatprep.subr.mxu0 0.0
    %112 = vmatpush1.msra.mxu0 %v73
    %113 = vmatprep.subr.mxu0 0.0
    %114 = vmatpush1.msra.mxu0 0.0
    %115 = vmatprep.subr.mxu0 0.0
    %116 = vmatpush1.msra.mxu0 0.0
    %117 = vmatprep.subr.mxu0 0.0
    %118 = vmatpush1.msra.mxu0 0.0
    %119 = vmatprep.subr.mxu0 0.0
    %120 = vmatpush1.msra.mxu0 0.0
    %121 = vmatprep.subr.mxu0 0.0
    %122 = vmatpush1.msra.mxu0 0.0
    %123 = vmatprep.subr.mxu0 0.0
    %124 = vmatpush1.msra.mxu0 0.0
    %125 = vmatprep.subr.mxu0 0.0
    %126 = vmatpush1.msra.mxu0 0.0
    %127 = vmatprep.subr.mxu0 0.0
    %128 = vmatpush1.msra.mxu0 0.0
    %129 = vmatprep.subr.mxu0 0.0
    %130 = vmatpush1.msra.mxu0 0.0
    %131 = vmatprep.subr.mxu0 0.0
    %132 = vmatpush1.msra.mxu0 0.0
    %133 = vmatprep.subr.mxu0 0.0
    %134 = vmatpush1.msra.mxu0 0.0
    %135 = vmatprep.subr.mxu0 0.0
    %136 = vmatpush1.msra.mxu0 0.0
    %137 = vmatprep.subr.mxu0 0.0
    %138 = vmatpush1.msra.mxu0 0.0
    %139 = vmatprep.subr.mxu0 0.0
    %140 = vmatpush1.msra.mxu0 0.0
    %141 = vmatprep.subr.mxu0 0.0
    %142 = vmatpush1.msra.mxu0 0.0
    %143 = vmatprep.subr.mxu0 0.0
    %144 = vmatpush1.msra.mxu0 0.0
    %145 = vmatprep.mubr.f32.mxu0 0.0
    %146 = vmatmul.mubr.f32.gmra.mrb[0].mxu0 %v54
    %v147 = vpop.f32.mrb[0].mxu0
    %v148 = vadd.f32 %v79, %v147
    %v149 = vpop.f32.mrb[0].mxu0
    %150 = vmatprep.mubr.f32.mxu0 0.0
    %151 = vmatmul.mubr.f32.gmra.mrb[0].mxu0 %v55
    %v152 = vpop.f32.mrb[0].mxu0
    %v153 = vadd.f32 %v79, %v152
    %v154 = vpop.f32.mrb[0].mxu0
    %155 = vmatprep.mubr.f32.mxu0 0.0
    %156 = vmatmul.mubr.f32.gmra.mrb[0].mxu0 %v56
    %v157 = vpop.f32.mrb[0].mxu0
    %v158 = vadd.f32 %v79, %v157
    %v159 = vpop.f32.mrb[0].mxu0
    %160 = vmatprep.mubr.f32.mxu0 0.0
    %161 = vmatmul.mubr.f32.gmra.mrb[0].mxu0 %v57
    %v162 = vpop.f32.mrb[0].mxu0
    %v163 = vadd.f32 %v79, %v162
    %v164 = vpop.f32.mrb[0].mxu0
    %165 = vdwg.mxu0
    %166 = vst [vmem:[#allocation8] sm:$0xff] %v148
    %167 = vst [vmem:[#allocation8 + $0x8] sm:$0xff] %v153
    %168 = vst [vmem:[#allocation8 + $0x10] sm:$0xff] %v158
    %169 = vst [vmem:[#allocation8 + $0x18] sm:$0xff] %v163
    // Predicated region
    $region26: #{tpu_custom_call.1} parent=1 // pred_check
      _
    $region27: #{tpu_custom_call.1} parent=1 // pred_check_branch
      %171 = sbr.rel (0) target = $region29
    $region28: #{tpu_custom_call.1} parent=1 // pred_region
      %s173 = ssub.s32 512, 512
      %174 = vsyncadd [#allocation4], %s173
      %s175 = sshll.u32 [#allocation8], 4
      %s176 = int_to_ptr.vmem [resolvable:$true] %s175
      %181 = dma.vmem_to_hbm [thread:$0]  %s176, 512, %s3, [#allocation4], 128, 128, 8
    $region29: #{tpu_custom_call.1} parent=1 // pred_fallthru
      _
    // Predicated region
    $region30: #{tpu_custom_call.1} parent=1 // pred_check
      _
    $region31: #{tpu_custom_call.1} parent=1 // pred_check_branch
      %183 = sbr.rel (0) target = $region33
    $region32: #{tpu_custom_call.1} parent=1 // pred_region
      %184 = dma.done [#allocation4], 512
    $region33: #{tpu_custom_call.1} parent=1 // pred_fallthru
      _
    %185 = vsyncpa [#allocation3], 1
    %186 = vsyncpa [#allocation6], 1
    %187 = vsyncpa [#allocation4], 1

</llo_original>
